<compile_context>
chip_gen: v7x
topology: tpu7x:2x2x1
jax: 0.10.0
libtpu: 0.0.40
codegen_flags: <defaults>
</compile_context>

<pallas_src>
import functools

import jax
import jax.numpy as jnp
from jax.experimental import pallas as pl
from jax.experimental.pallas import tpu as pltpu

STATE_DIM = 32
ACTION_DIM = 8
NOISE_DIM = 3
LATENT = 750
MAX_ACTION_VALUE = 1.0

IN_PAD = 128      # state(32) + noise(3) padded to a full lane group
LATENT_PAD = 768  # 750 padded to a multiple of 128 (zero cols/rows, no effect)
OUT_PAD = 128     # action(8) padded to a full lane group -> lane-dense store
MAX_TB = 256      # batch tile: fills the 256-row MXU on v6e/v7x; multiple of 8


def _round_up(n, m):
    return ((n + m - 1) // m) * m


def _generator_kernel(x_ref, w1_ref, b1_ref, w2_ref, b2_ref, out_ref,
                      *, max_action_value):
    # x_ref   : (tb, IN_PAD)          bf16   cols >= 35  are zero
    # w1_ref  : (IN_PAD, LATENT_PAD)  bf16   rows >= 35 / cols >= 750 are zero
    # b1_ref  : (1, LATENT_PAD)       f32    cols >= 750 are zero
    # w2_ref  : (LATENT_PAD, OUT_PAD) bf16   rows >= 750 / cols >= 8 are zero
    # b2_ref  : (1, OUT_PAD)          f32    cols >= 8   are zero
    # out_ref : (tb, OUT_PAD)         f32

    # ---- embedding_l1 + ReLU  (MXU, bf16 inputs / f32 accumulation) ----
    h = jnp.dot(x_ref[...], w1_ref[...], preferred_element_type=jnp.float32)
    h = jnp.maximum(h + b1_ref[...], 0.0)

    # ---- gen_l + tanh (* max_action_value) ----
    a = jnp.dot(h.astype(jnp.bfloat16), w2_ref[...],
                preferred_element_type=jnp.float32) + b2_ref[...]
    a = jnp.tanh(a)
    if max_action_value != 1.0:            # statically elided when == 1.0
        a = a * jnp.float32(max_action_value)
    out_ref[...] = a


def init_generator_params(key, state_dim=STATE_DIM, action_dim=ACTION_DIM,
                          noise_dim=NOISE_DIM, latent=LATENT):
    """Deterministic init mimicking nn.Linear default (U[-1/sqrt(fan_in), +])."""
    k1, k2, k3, k4 = jax.random.split(key, 4)
    in1 = state_dim + noise_dim
    lim1 = 1.0 / jnp.sqrt(jnp.float32(in1))
    lim2 = 1.0 / jnp.sqrt(jnp.float32(latent))
    w1 = jax.random.uniform(k1, (in1, latent), jnp.float32, -lim1, lim1)
    b1 = jax.random.uniform(k2, (1, latent), jnp.float32, -lim1, lim1)
    w2 = jax.random.uniform(k3, (latent, action_dim), jnp.float32, -lim2, lim2)
    b2 = jax.random.uniform(k4, (1, action_dim), jnp.float32, -lim2, lim2)
    return {"w1": w1, "b1": b1, "w2": w2, "b2": b2}


def generator_forward(state, params, noise_key,
                      state_dim=STATE_DIM, action_dim=ACTION_DIM,
                      noise_dim=NOISE_DIM, max_action_value=MAX_ACTION_VALUE):
    # ---- wrapper glue: reshape, noise, padding, weight layout prep ----
    x = jnp.reshape(state, (-1, state_dim)).astype(jnp.float32)
    b = x.shape[0]
    latent = params["w1"].shape[1]
    in_dim = state_dim + noise_dim

    tb = min(MAX_TB, _round_up(max(b, 1), 8))
    b_pad = _round_up(b, tb)
    num_tiles = b_pad // tb

    # i.i.d. U[0,1) noise, like torch.rand.
    # TODO(synk): distributionally identical to torch.rand but not bit-identical
    #             to torch's RNG stream.
    noise = jax.random.uniform(noise_key, (b, noise_dim), jnp.float32)

    # Fuse the concat into padded input columns (extra cols hit zero W1 rows).
    x_cat = jnp.concatenate([x, noise], axis=1)                       # (b, 35)
    x_pad = jnp.pad(x_cat, ((0, b_pad - b), (0, IN_PAD - in_dim))
                    ).astype(jnp.bfloat16)                            # (b_pad, 128)

    w1 = jnp.pad(params["w1"],
                 ((0, IN_PAD - in_dim), (0, LATENT_PAD - latent))
                 ).astype(jnp.bfloat16)                               # (128, 768)
    b1 = jnp.pad(params["b1"].reshape(1, latent),
                 ((0, 0), (0, LATENT_PAD - latent))).astype(jnp.float32)
    w2 = jnp.pad(params["w2"],
                 ((0, LATENT_PAD - latent), (0, OUT_PAD - action_dim))
                 ).astype(jnp.bfloat16)                               # (768, 128)
    b2 = jnp.pad(params["b2"].reshape(1, action_dim),
                 ((0, 0), (0, OUT_PAD - action_dim))).astype(jnp.float32)

    kernel = functools.partial(_generator_kernel,
                               max_action_value=float(max_action_value))

    flops = 2 * b_pad * (IN_PAD * LATENT_PAD + LATENT_PAD * OUT_PAD)
    bytes_accessed = (x_pad.size * 2 + w1.size * 2 + b1.size * 4
                      + w2.size * 2 + b2.size * 4 + b_pad * OUT_PAD * 4)
    cost = pl.CostEstimate(flops=flops, transcendentals=b_pad * OUT_PAD,
                           bytes_accessed=bytes_accessed)

    out = pl.pallas_call(
        kernel,
        out_shape=jax.ShapeDtypeStruct((b_pad, OUT_PAD), jnp.float32),
        grid=(num_tiles,),
        in_specs=[
            pl.BlockSpec((tb, IN_PAD), lambda i: (i, 0)),             # x tile
            pl.BlockSpec((IN_PAD, LATENT_PAD), lambda i: (0, 0)),     # W1 (resident)
            pl.BlockSpec((1, LATENT_PAD), lambda i: (0, 0)),          # b1
            pl.BlockSpec((LATENT_PAD, OUT_PAD), lambda i: (0, 0)),    # W2 (resident)
            pl.BlockSpec((1, OUT_PAD), lambda i: (0, 0)),             # b2
        ],
        out_specs=pl.BlockSpec((tb, OUT_PAD), lambda i: (i, 0)),
        compiler_params=pltpu.CompilerParams(
            dimension_semantics=("parallel",),     # batch tiles shard across v7x's 2 TCs
            vmem_limit_bytes=64 * 1024 * 1024),
        cost_estimate=cost,
    )(x_pad, w1, b1, w2, b2)

    return out[:b, :action_dim]


if __name__ == "__main__":
    key = jax.random.PRNGKey(0)
    pkey, skey, nkey = jax.random.split(key, 3)

    params = init_generator_params(pkey)

    # Example "state" batch: (batch=8, state_dim=32)
    state = jax.random.normal(skey, (8, STATE_DIM), dtype=jnp.float32)

    fwd = jax.jit(lambda s, p, k: generator_forward(s, p, k))
    action = jax.block_until_ready(fwd(state, params, nkey))
    action2 = jax.block_until_ready(fwd(state, params, nkey))

    assert action.shape == (8, ACTION_DIM)
    assert bool(jnp.all(jnp.isfinite(action)))
    assert bool(jnp.all(jnp.abs(action) <= MAX_ACTION_VALUE + 1e-6))
    assert bool(jnp.all(action == action2))   # deterministic given the same noise key
    print("KERNEL_OK")
</pallas_src>

<mosaic_0001>
module attributes {stable_mosaic.version = 11 : i64} {
  func.func @_generator_kernel(%arg0: i32, %arg1: memref<8x128xbf16, #tpu.memory_space<vmem>>, %arg2: memref<128x768xbf16, #tpu.memory_space<vmem>>, %arg3: memref<1x768xf32, #tpu.memory_space<vmem>>, %arg4: memref<768x128xbf16, #tpu.memory_space<vmem>>, %arg5: memref<1x128xf32, #tpu.memory_space<vmem>>, %arg6: memref<8x128xf32, #tpu.memory_space<vmem>>) attributes {dimension_semantics = [#tpu.dimension_semantics<parallel>], iteration_bounds = array<i64: 1>, scalar_prefetch = 0 : i64, scratch_operands = 0 : i64, tpu.core_type = #tpu.core_type<tc>, window_params = [{transform_indices = @transform_0, window_bounds = array<i64: 8, 128>}, {pipeline_mode = #tpu.pipeline_mode<synchronous>, transform_indices = @transform_1, window_bounds = array<i64: 128, 768>}, {pipeline_mode = #tpu.pipeline_mode<synchronous>, transform_indices = @transform_2, window_bounds = array<i64: 1, 768>}, {pipeline_mode = #tpu.pipeline_mode<synchronous>, transform_indices = @transform_3, window_bounds = array<i64: 768, 128>}, {pipeline_mode = #tpu.pipeline_mode<synchronous>, transform_indices = @transform_4, window_bounds = array<i64: 1, 128>}, {transform_indices = @transform_5, window_bounds = array<i64: 8, 128>}]} {
    %c0 = arith.constant 0 : index
    %c0_0 = arith.constant 0 : index
    %0 = vector.load %arg1[%c0, %c0_0] : memref<8x128xbf16, #tpu.memory_space<vmem>>, vector<8x128xbf16>
    %c0_1 = arith.constant 0 : index
    %c0_2 = arith.constant 0 : index
    %1 = vector.load %arg2[%c0_1, %c0_2] : memref<128x768xbf16, #tpu.memory_space<vmem>>, vector<128x768xbf16>
    %cst = arith.constant dense<0.000000e+00> : vector<8x768xf32>
    %2 = tpu.matmul %0, %1, %cst {dimension_numbers = #tpu.dot_dimension_numbers<[1], [0], [0], [1], [0, 0, 1, 1], [], []>} : vector<8x128xbf16>, vector<128x768xbf16>, vector<8x768xf32> -> vector<8x768xf32>
    %c0_3 = arith.constant 0 : index
    %c0_4 = arith.constant 0 : index
    %3 = vector.load %arg3[%c0_3, %c0_4] : memref<1x768xf32, #tpu.memory_space<vmem>>, vector<1x768xf32>
    %4 = vector.broadcast %3 : vector<1x768xf32> to vector<8x768xf32>
    %5 = arith.addf %2, %4 : vector<8x768xf32>
    %cst_5 = arith.constant 0.000000e+00 : f32
    %6 = vector.broadcast %cst_5 : f32 to vector<8x768xf32>
    %7 = arith.maximumf %5, %6 : vector<8x768xf32>
    %8 = arith.truncf %7 : vector<8x768xf32> to vector<8x768xbf16>
    %c0_6 = arith.constant 0 : index
    %c0_7 = arith.constant 0 : index
    %9 = vector.load %arg4[%c0_6, %c0_7] : memref<768x128xbf16, #tpu.memory_space<vmem>>, vector<768x128xbf16>
    %cst_8 = arith.constant dense<0.000000e+00> : vector<8x128xf32>
    %10 = tpu.matmul %8, %9, %cst_8 {dimension_numbers = #tpu.dot_dimension_numbers<[1], [0], [0], [1], [0, 0, 1, 1], [], []>} : vector<8x768xbf16>, vector<768x128xbf16>, vector<8x128xf32> -> vector<8x128xf32>
    %c0_9 = arith.constant 0 : index
    %c0_10 = arith.constant 0 : index
    %11 = vector.load %arg5[%c0_9, %c0_10] : memref<1x128xf32, #tpu.memory_space<vmem>>, vector<1x128xf32>
    %12 = vector.broadcast %11 : vector<1x128xf32> to vector<8x128xf32>
    %13 = arith.addf %10, %12 : vector<8x128xf32>
    %14 = math.tanh %13 : vector<8x128xf32>
    %c0_11 = arith.constant 0 : index
    %c0_12 = arith.constant 0 : index
    %15 = vector.load %arg6[%c0_11, %c0_12] : memref<8x128xf32, #tpu.memory_space<vmem>>, vector<8x128xf32>
    tpu.vector_store %arg6[%c0_11, %c0_12], %14 {strides = array<i32>} : memref<8x128xf32, #tpu.memory_space<vmem>>, vector<8x128xf32>,
    return
  }
  func.func @transform_0(%arg0: i32) -> (i32, i32) {
    %c0_i32 = arith.constant 0 : i32
    %c0_i32_0 = arith.constant 0 : i32
    return %arg0, %c0_i32 : i32, i32
  }
  func.func @transform_1(%arg0: i32) -> (i32, i32) {
    %c0_i32 = arith.constant 0 : i32
    %c0_i32_0 = arith.constant 0 : i32
    %c0_i32_1 = arith.constant 0 : i32
    return %c0_i32, %c0_i32_0 : i32, i32
  }
  func.func @transform_2(%arg0: i32) -> (i32, i32) {
    %c0_i32 = arith.constant 0 : i32
    %c0_i32_0 = arith.constant 0 : i32
    %c0_i32_1 = arith.constant 0 : i32
    return %c0_i32, %c0_i32_0 : i32, i32
  }
  func.func @transform_3(%arg0: i32) -> (i32, i32) {
    %c0_i32 = arith.constant 0 : i32
    %c0_i32_0 = arith.constant 0 : i32
    %c0_i32_1 = arith.constant 0 : i32
    return %c0_i32, %c0_i32_0 : i32, i32
  }
  func.func @transform_4(%arg0: i32) -> (i32, i32) {
    %c0_i32 = arith.constant 0 : i32
    %c0_i32_0 = arith.constant 0 : i32
    %c0_i32_1 = arith.constant 0 : i32
    return %c0_i32, %c0_i32_0 : i32, i32
  }
  func.func @transform_5(%arg0: i32) -> (i32, i32) {
    %c0_i32 = arith.constant 0 : i32
    %c0_i32_0 = arith.constant 0 : i32
    return %arg0, %c0_i32 : i32, i32
  }
}

</mosaic_0001>

<llo_original>
// kernel: _lambda_.1
$region0: #{_lambda_.1}
  #allocation0 [shape = 'u32[]', space=smem, size = 0x4, offset = 0x4, fixed_abs, tag = 'smem constant byte address 0x4 - core index']
  #allocation1 [shape = 'u32[144,128]{1,0:T(1,128)}', space=vmem, size = 0x12000, scoped, tag = 'internal scratch']
  %s0 = inlined_call_operand.hbm [shape: bf16[8,128], index: 0, kind: input, shape index: {}]
  %s1 = inlined_call_operand.hbm [shape: bf16[128,768], index: 1, kind: input, shape index: {}]
  %s2 = inlined_call_operand.hbm [shape: f32[1,768], index: 2, kind: input, shape index: {}]
  %s3 = inlined_call_operand.hbm [shape: bf16[768,128], index: 3, kind: input, shape index: {}]
  %s4 = inlined_call_operand.hbm [shape: f32[1,128], index: 4, kind: input, shape index: {}]
  %s5 = inlined_call_operand.hbm [shape: f32[8,128], index: 5, kind: output, shape index: {}]
  %s6 = sld [smem:[#allocation0]]
  $region50: #{_lambda_.1} parent=0
    _
  %s8 = ssub.s32 1, %s6
  %s9 = scalar_select 0, %s8, %s6
  $region1: #{_lambda_.1} parent=0
    #allocation2 [shape = 'u8[2048]{0}', space=vmem, size = 0x800, scoped, tag = 'input window, operand 0, single buffered']
    #allocation3 [shape = 's32[1]{0}', space=sflag, size = 0x4, scoped, tag = 'scoped memory for _lambda_.1']
    #allocation4 [shape = 's32[1]{0}', space=sflag, size = 0x4, scoped, tag = 'scoped memory for _lambda_.1']
    #allocation5 [shape = 'u8[196608]{0}', space=vmem, size = 0x30000, scoped, tag = 'input window, operand 1, single buffered']
    #allocation6 [shape = 's32[1]{0}', space=sflag, size = 0x4, scoped, tag = 'scoped memory for _lambda_.1']
    #allocation7 [shape = 'u8[3072]{0}', space=vmem, size = 0xc00, scoped, tag = 'input window, operand 2, single buffered']
    #allocation8 [shape = 'u8[196608]{0}', space=vmem, size = 0x30000, scoped, tag = 'input window, operand 3, single buffered']
    #allocation9 [shape = 's32[1]{0}', space=sflag, size = 0x4, scoped, tag = 'scoped memory for _lambda_.1']
    #allocation10 [shape = 'u8[512]{0}', space=vmem, size = 0x400, scoped, tag = 'input window, operand 4, single buffered']
    #allocation11 [shape = 'u8[4096]{0}', space=vmem, size = 0x1000, scoped, tag = 'output window, operand 0, single buffered']
    %10 = vsyncpa [#allocation3], 0
    %11 = vsyncpa [#allocation6], 0
    %12 = vsyncpa [#allocation9], 0
    %13 = vsyncpa [#allocation4], 0
    // Predicated region
    $region2: #{_lambda_.1} parent=1 // pred_check
      _
    $region3: #{_lambda_.1} parent=1 // pred_check_branch
      %15 = sbr.rel (0) target = $region5
    $region4: #{_lambda_.1} parent=1 // pred_region
      %s17 = ssub.s32 64, 64
      %18 = vsyncadd [#allocation3], %s17
      %s20 = sshll.u32 [#allocation2], 4
      %s21 = int_to_ptr.vmem [resolvable:$true] %s20
      %23 = dma.hbm_to_vmem [thread:$0]  %s0, 64, %s21, [#allocation3]
    $region5: #{_lambda_.1} parent=1 // pred_fallthru
      _
    // Predicated region
    $region6: #{_lambda_.1} parent=1 // pred_check
      _
    $region7: #{_lambda_.1} parent=1 // pred_check_branch
      %25 = sbr.rel (0) target = $region9
    $region8: #{_lambda_.1} parent=1 // pred_region
      %s27 = ssub.s32 6144, 6144
      %28 = vsyncadd [#allocation6], %s27
      %s29 = sshll.u32 [#allocation5], 4
      %s30 = int_to_ptr.vmem [resolvable:$true] %s29
      %35 = dma.hbm_to_vmem [thread:$0]  %s1, 6144, %s30, [#allocation6], 384, 384, 24
    $region9: #{_lambda_.1} parent=1 // pred_fallthru
      _
    // Predicated region
    $region10: #{_lambda_.1} parent=1 // pred_check
      _
    $region11: #{_lambda_.1} parent=1 // pred_check_branch
      %37 = sbr.rel (0) target = $region13
    $region12: #{_lambda_.1} parent=1 // pred_region
      %s39 = ssub.s32 96, 96
      %40 = vsyncadd [#allocation6], %s39
      %s42 = sshll.u32 [#allocation7], 4
      %s43 = int_to_ptr.vmem [resolvable:$true] %s42
      %45 = dma.hbm_to_vmem [thread:$0]  %s2, 96, %s43, [#allocation6]
    $region13: #{_lambda_.1} parent=1 // pred_fallthru
      _
    // Predicated region
    $region14: #{_lambda_.1} parent=1 // pred_check
      _
    $region15: #{_lambda_.1} parent=1 // pred_check_branch
      %47 = sbr.rel (0) target = $region17
    $region16: #{_lambda_.1} parent=1 // pred_region
      %s49 = ssub.s32 6144, 6144
      %50 = vsyncadd [#allocation9], %s49
      %s51 = sshll.u32 [#allocation8], 4
      %s52 = int_to_ptr.vmem [resolvable:$true] %s51
      %57 = dma.hbm_to_vmem [thread:$0]  %s3, 6144, %s52, [#allocation9], 64, 64, 4
    $region17: #{_lambda_.1} parent=1 // pred_fallthru
      _
    // Predicated region
    $region18: #{_lambda_.1} parent=1 // pred_check
      _
    $region19: #{_lambda_.1} parent=1 // pred_check_branch
      %59 = sbr.rel (0) target = $region21
    $region20: #{_lambda_.1} parent=1 // pred_region
      %s61 = ssub.s32 16, 16
      %62 = vsyncadd [#allocation9], %s61
      %s64 = sshll.u32 [#allocation10], 4
      %s65 = int_to_ptr.vmem [resolvable:$true] %s64
      %67 = dma.hbm_to_vmem [thread:$0]  %s4, 16, %s65, [#allocation9]
    $region21: #{_lambda_.1} parent=1 // pred_fallthru
      _
    // Predicated region
    $region22: #{_lambda_.1} parent=1 // pred_check
      _
    $region23: #{_lambda_.1} parent=1 // pred_check_branch
      %69 = sbr.rel (0) target = $region25
    $region24: #{_lambda_.1} parent=1 // pred_region
      %70 = dma.done [#allocation3], 64
    $region25: #{_lambda_.1} parent=1 // pred_fallthru
      _
    // Predicated region
    $region26: #{_lambda_.1} parent=1 // pred_check
      _
    $region27: #{_lambda_.1} parent=1 // pred_check_branch
      %72 = sbr.rel (0) target = $region29
    $region28: #{_lambda_.1} parent=1 // pred_region
      %73 = dma.done [#allocation6], 6144
    $region29: #{_lambda_.1} parent=1 // pred_fallthru
      _
    // Predicated region
    $region30: #{_lambda_.1} parent=1 // pred_check
      _
    $region31: #{_lambda_.1} parent=1 // pred_check_branch
      %75 = sbr.rel (0) target = $region33
    $region32: #{_lambda_.1} parent=1 // pred_region
      %76 = dma.done [#allocation6], 96
    $region33: #{_lambda_.1} parent=1 // pred_fallthru
      _
    // Predicated region
    $region34: #{_lambda_.1} parent=1 // pred_check
      _
    $region35: #{_lambda_.1} parent=1 // pred_check_branch
      %78 = sbr.rel (0) target = $region37
    $region36: #{_lambda_.1} parent=1 // pred_region
      %79 = dma.done [#allocation9], 6144
    $region37: #{_lambda_.1} parent=1 // pred_fallthru
      _
    // Predicated region
    $region38: #{_lambda_.1} parent=1 // pred_check
      _
    $region39: #{_lambda_.1} parent=1 // pred_check_branch
      %81 = sbr.rel (0) target = $region41
    $region40: #{_lambda_.1} parent=1 // pred_region
      %82 = dma.done [#allocation9], 16
    $region41: #{_lambda_.1} parent=1 // pred_fallthru
      _
    %v84 = vld [vmem:[#allocation2] sm:$0xf]
    %v85 = vld [vmem:[#allocation5] sm:$0xff]
    %v86 = vld [vmem:[#allocation5 + $0x8] sm:$0xff]
    %v87 = vld [vmem:[#allocation5 + $0x10] sm:$0xff]
    %v88 = vld [vmem:[#allocation5 + $0x18] sm:$0xff]
    %v89 = vld [vmem:[#allocation5 + $0x20] sm:$0xff]
    %v90 = vld [vmem:[#allocation5 + $0x28] sm:$0xff]
    %v91 = vld [vmem:[#allocation5 + $0x30] sm:$0xff]
    %v92 = vld [vmem:[#allocation5 + $0x38] sm:$0xff]
    %v93 = vld [vmem:[#allocation5 + $0x40] sm:$0xff]
    %v94 = vld [vmem:[#allocation5 + $0x48] sm:$0xff]
    %v95 = vld [vmem:[#allocation5 + $0x50] sm:$0xff]
    %v96 = vld [vmem:[#allocation5 + $0x58] sm:$0xff]
    %v97 = vld [vmem:[#allocation5 + $0x60] sm:$0xff]
    %v98 = vld [vmem:[#allocation5 + $0x68] sm:$0xff]
    %v99 = vld [vmem:[#allocation5 + $0x70] sm:$0xff]
    %v100 = vld [vmem:[#allocation5 + $0x78] sm:$0xff]
    %v101 = vld [vmem:[#allocation5 + $0x80] sm:$0xff]
    %v102 = vld [vmem:[#allocation5 + $0x88] sm:$0xff]
    %v103 = vld [vmem:[#allocation5 + $0x90] sm:$0xff]
    %v104 = vld [vmem:[#allocation5 + $0x98] sm:$0xff]
    %v105 = vld [vmem:[#allocation5 + $0xa0] sm:$0xff]
    %v106 = vld [vmem:[#allocation5 + $0xa8] sm:$0xff]
    %v107 = vld [vmem:[#allocation5 + $0xb0] sm:$0xff]
    %v108 = vld [vmem:[#allocation5 + $0xb8] sm:$0xff]
    %v109 = vld [vmem:[#allocation5 + $0xc0] sm:$0xff]
    %v110 = vld [vmem:[#allocation5 + $0xc8] sm:$0xff]
    %v111 = vld [vmem:[#allocation5 + $0xd0] sm:$0xff]
    %v112 = vld [vmem:[#allocation5 + $0xd8] sm:$0xff]
    %v113 = vld [vmem:[#allocation5 + $0xe0] sm:$0xff]
    %v114 = vld [vmem:[#allocation5 + $0xe8] sm:$0xff]
    %v115 = vld [vmem:[#allocation5 + $0xf0] sm:$0xff]
    %v116 = vld [vmem:[#allocation5 + $0xf8] sm:$0xff]
    %v117 = vld [vmem:[#allocation5 + $0x100] sm:$0xff]
    %v118 = vld [vmem:[#allocation5 + $0x108] sm:$0xff]
    %v119 = vld [vmem:[#allocation5 + $0x110] sm:$0xff]
    %v120 = vld [vmem:[#allocation5 + $0x118] sm:$0xff]
    %v121 = vld [vmem:[#allocation5 + $0x120] sm:$0xff]
    %v122 = vld [vmem:[#allocation5 + $0x128] sm:$0xff]
    %v123 = vld [vmem:[#allocation5 + $0x130] sm:$0xff]
    %v124 = vld [vmem:[#allocation5 + $0x138] sm:$0xff]
    %v125 = vld [vmem:[#allocation5 + $0x140] sm:$0xff]
    %v126 = vld [vmem:[#allocation5 + $0x148] sm:$0xff]
    %v127 = vld [vmem:[#allocation5 + $0x150] sm:$0xff]
    %v128 = vld [vmem:[#allocation5 + $0x158] sm:$0xff]
    %v129 = vld [vmem:[#allocation5 + $0x160] sm:$0xff]
    %v130 = vld [vmem:[#allocation5 + $0x168] sm:$0xff]
    %v131 = vld [vmem:[#allocation5 + $0x170] sm:$0xff]
    %v132 = vld [vmem:[#allocation5 + $0x178] sm:$0xff]
    %v133 = vld [vmem:[#allocation7] sm:$0x3f]
    %v135 = vlaneseq
    %v136 = vshrl.u32 %v135, 7
    %v137 = vsub.s32 0, %v136
    %v138 = vrot.slane %v133, %v137
    %v139 = vlaneseq
    %v140 = vshrl.u32 %v139, 7
    %v141 = vsub.s32 1, %v140
    %v142 = vrot.slane %v133, %v141
    %v143 = vlaneseq
    %v144 = vshrl.u32 %v143, 7
    %v145 = vsub.s32 2, %v144
    %v146 = vrot.slane %v133, %v145
    %v147 = vlaneseq
    %v148 = vshrl.u32 %v147, 7
    %v149 = vsub.s32 3, %v148
    %v150 = vrot.slane %v133, %v149
    %v151 = vlaneseq
    %v152 = vshrl.u32 %v151, 7
    %v153 = vsub.s32 4, %v152
    %v154 = vrot.slane %v133, %v153
    %v155 = vlaneseq
    %v156 = vshrl.u32 %v155, 7
    %v157 = vsub.s32 5, %v156
    %v158 = vrot.slane %v133, %v157
    %v213 = vunpack.c.l.b16 %v85
    %v214 = vunpack.c.h.b16 %v85
    %v215 = vunpack.c.l.b16 %v86
    %v216 = vunpack.c.h.b16 %v86
    %v217 = vunpack.c.l.b16 %v87
    %v218 = vunpack.c.h.b16 %v87
    %v219 = vunpack.c.l.b16 %v88
    %v220 = vunpack.c.h.b16 %v88
    %v221 = vunpack.c.l.b16 %v89
    %v222 = vunpack.c.h.b16 %v89
    %v223 = vunpack.c.l.b16 %v90
    %v224 = vunpack.c.h.b16 %v90
    %v225 = vunpack.c.l.b16 %v91
    %v226 = vunpack.c.h.b16 %v91
    %v227 = vunpack.c.l.b16 %v92
    %v228 = vunpack.c.h.b16 %v92
    %v229 = vunpack.c.l.b16 %v93
    %v230 = vunpack.c.h.b16 %v93
    %v231 = vunpack.c.l.b16 %v94
    %v232 = vunpack.c.h.b16 %v94
    %v233 = vunpack.c.l.b16 %v95
    %v234 = vunpack.c.h.b16 %v95
    %v235 = vunpack.c.l.b16 %v96
    %v236 = vunpack.c.h.b16 %v96
    %v237 = vunpack.c.l.b16 %v97
    %v238 = vunpack.c.h.b16 %v97
    %v239 = vunpack.c.l.b16 %v98
    %v240 = vunpack.c.h.b16 %v98
    %v241 = vunpack.c.l.b16 %v99
    %v242 = vunpack.c.h.b16 %v99
    %v243 = vunpack.c.l.b16 %v100
    %v244 = vunpack.c.h.b16 %v100
    %v245 = vunpack.c.l.b16 %v101
    %v246 = vunpack.c.h.b16 %v101
    %v247 = vunpack.c.l.b16 %v102
    %v248 = vunpack.c.h.b16 %v102
    %v249 = vunpack.c.l.b16 %v103
    %v250 = vunpack.c.h.b16 %v103
    %v251 = vunpack.c.l.b16 %v104
    %v252 = vunpack.c.h.b16 %v104
    %v253 = vunpack.c.l.b16 %v105
    %v254 = vunpack.c.h.b16 %v105
    %v255 = vunpack.c.l.b16 %v106
    %v256 = vunpack.c.h.b16 %v106
    %v257 = vunpack.c.l.b16 %v107
    %v258 = vunpack.c.h.b16 %v107
    %v259 = vunpack.c.l.b16 %v108
    %v260 = vunpack.c.h.b16 %v108
    %v261 = vunpack.c.l.b16 %v109
    %v262 = vunpack.c.h.b16 %v109
    %v263 = vunpack.c.l.b16 %v110
    %v264 = vunpack.c.h.b16 %v110
    %v265 = vunpack.c.l.b16 %v111
    %v266 = vunpack.c.h.b16 %v111
    %v267 = vunpack.c.l.b16 %v112
    %v268 = vunpack.c.h.b16 %v112
    %v269 = vunpack.c.l.b16 %v113
    %v270 = vunpack.c.h.b16 %v113
    %v271 = vunpack.c.l.b16 %v114
    %v272 = vunpack.c.h.b16 %v114
    %v273 = vunpack.c.l.b16 %v115
    %v274 = vunpack.c.h.b16 %v115
    %v275 = vunpack.c.l.b16 %v116
    %v276 = vunpack.c.h.b16 %v116
    %v277 = vunpack.c.l.b16 %v117
    %v278 = vunpack.c.h.b16 %v117
    %v279 = vunpack.c.l.b16 %v118
    %v280 = vunpack.c.h.b16 %v118
    %v281 = vunpack.c.l.b16 %v119
    %v282 = vunpack.c.h.b16 %v119
    %v283 = vunpack.c.l.b16 %v120
    %v284 = vunpack.c.h.b16 %v120
    %v285 = vunpack.c.l.b16 %v121
    %v286 = vunpack.c.h.b16 %v121
    %v287 = vunpack.c.l.b16 %v122
    %v288 = vunpack.c.h.b16 %v122
    %v289 = vunpack.c.l.b16 %v123
    %v290 = vunpack.c.h.b16 %v123
    %v291 = vunpack.c.l.b16 %v124
    %v292 = vunpack.c.h.b16 %v124
    %v293 = vunpack.c.l.b16 %v125
    %v294 = vunpack.c.h.b16 %v125
    %v295 = vunpack.c.l.b16 %v126
    %v296 = vunpack.c.h.b16 %v126
    %v297 = vunpack.c.l.b16 %v127
    %v298 = vunpack.c.h.b16 %v127
    %v299 = vunpack.c.l.b16 %v128
    %v300 = vunpack.c.h.b16 %v128
    %v301 = vunpack.c.l.b16 %v129
    %v302 = vunpack.c.h.b16 %v129
    %v303 = vunpack.c.l.b16 %v130
    %v304 = vunpack.c.h.b16 %v130
    %v305 = vunpack.c.l.b16 %v131
    %v306 = vunpack.c.h.b16 %v131
    %v307 = vunpack.c.l.b16 %v132
    %v308 = vunpack.c.h.b16 %v132
    %v309 = vpack.c.b16 %v219, %v213
    %v310 = vpack.c.b16 %v220, %v214
    %v311 = vpack.c.b16 %v221, %v215
    %v312 = vpack.c.b16 %v222, %v216
    %v313 = vpack.c.b16 %v223, %v217
    %v314 = vpack.c.b16 %v224, %v218
    %v315 = vpack.c.b16 %v231, %v225
    %v316 = vpack.c.b16 %v232, %v226
    %v317 = vpack.c.b16 %v233, %v227
    %v318 = vpack.c.b16 %v234, %v228
    %v319 = vpack.c.b16 %v235, %v229
    %v320 = vpack.c.b16 %v236, %v230
    %v321 = vpack.c.b16 %v243, %v237
    %v322 = vpack.c.b16 %v244, %v238
    %v323 = vpack.c.b16 %v245, %v239
    %v324 = vpack.c.b16 %v246, %v240
    %v325 = vpack.c.b16 %v247, %v241
    %v326 = vpack.c.b16 %v248, %v242
    %v327 = vpack.c.b16 %v255, %v249
    %v328 = vpack.c.b16 %v256, %v250
    %v329 = vpack.c.b16 %v257, %v251
    %v330 = vpack.c.b16 %v258, %v252
    %v331 = vpack.c.b16 %v259, %v253
    %v332 = vpack.c.b16 %v260, %v254
    %v333 = vpack.c.b16 %v267, %v261
    %v334 = vpack.c.b16 %v268, %v262
    %v335 = vpack.c.b16 %v269, %v263
    %v336 = vpack.c.b16 %v270, %v264
    %v337 = vpack.c.b16 %v271, %v265
    %v338 = vpack.c.b16 %v272, %v266
    %v339 = vpack.c.b16 %v279, %v273
    %v340 = vpack.c.b16 %v280, %v274
    %v341 = vpack.c.b16 %v281, %v275
    %v342 = vpack.c.b16 %v282, %v276
    %v343 = vpack.c.b16 %v283, %v277
    %v344 = vpack.c.b16 %v284, %v278
    %v345 = vpack.c.b16 %v291, %v285
    %v346 = vpack.c.b16 %v292, %v286
    %v347 = vpack.c.b16 %v293, %v287
    %v348 = vpack.c.b16 %v294, %v288
    %v349 = vpack.c.b16 %v295, %v289
    %v350 = vpack.c.b16 %v296, %v290
    %v351 = vpack.c.b16 %v303, %v297
    %v352 = vpack.c.b16 %v304, %v298
    %v353 = vpack.c.b16 %v305, %v299
    %v354 = vpack.c.b16 %v306, %v300
    %v355 = vpack.c.b16 %v307, %v301
    %v356 = vpack.c.b16 %v308, %v302
    %405 = vmatprep.subr.bf16.mxu0 %v310
    %406 = vmatpush1.bf16.msra.mxu0 %v309
    %407 = vmatprep.subr.bf16.mxu0 %v316
    %408 = vmatpush1.bf16.msra.mxu0 %v315
    %409 = vmatprep.subr.bf16.mxu0 %v322
    %410 = vmatpush1.bf16.msra.mxu0 %v321
    %411 = vmatprep.subr.bf16.mxu0 %v328
    %412 = vmatpush1.bf16.msra.mxu0 %v327
    %413 = vmatprep.subr.bf16.mxu0 %v334
    %414 = vmatpush1.bf16.msra.mxu0 %v333
    %415 = vmatprep.subr.bf16.mxu0 %v340
    %416 = vmatpush1.bf16.msra.mxu0 %v339
    %417 = vmatprep.subr.bf16.mxu0 %v346
    %418 = vmatpush1.bf16.msra.mxu0 %v345
    %419 = vmatprep.subr.bf16.mxu0 %v352
    %420 = vmatpush1.bf16.msra.mxu0 %v351
    %421 = vmatprep.subr.bf16.mxu0 0
    %422 = vmatpush1.bf16.msra.mxu0 0
    %423 = vmatprep.subr.bf16.mxu0 0
    %424 = vmatpush1.bf16.msra.mxu0 0
    %425 = vmatprep.subr.bf16.mxu0 0
    %426 = vmatpush1.bf16.msra.mxu0 0
    %427 = vmatprep.subr.bf16.mxu0 0
    %428 = vmatpush1.bf16.msra.mxu0 0
    %429 = vmatprep.subr.bf16.mxu0 0
    %430 = vmatpush1.bf16.msra.mxu0 0
    %431 = vmatprep.subr.bf16.mxu0 0
    %432 = vmatpush1.bf16.msra.mxu0 0
    %433 = vmatprep.subr.bf16.mxu0 0
    %434 = vmatpush1.bf16.msra.mxu0 0
    %435 = vmatprep.subr.bf16.mxu0 0
    %436 = vmatpush1.bf16.msra.mxu0 0
    %437 = vmatprep.mubr.bf16.mxu0 0
    %438 = vmatmul.mubr.bf16.gmra.mrb[0].mxu0 %v84
    %v439 = vpop.f32.mrb[0].mxu0
    %v440 = vadd.f32 %v138, %v439
    %v441 = vpop.f32.mrb[0].mxu0
    %v442 = vadd.f32 %v142, %v441
    %v443 = vpop.f32.mrb[0].mxu0
    %v444 = vpop.f32.mrb[0].mxu0
    %445 = vdwg.mxu0
    %446 = vmatprep.subr.bf16.mxu0 %v312
    %447 = vmatpush1.bf16.msra.mxu0 %v311
    %448 = vmatprep.subr.bf16.mxu0 %v318
    %449 = vmatpush1.bf16.msra.mxu0 %v317
    %450 = vmatprep.subr.bf16.mxu0 %v324
    %451 = vmatpush1.bf16.msra.mxu0 %v323
    %452 = vmatprep.subr.bf16.mxu0 %v330
    %453 = vmatpush1.bf16.msra.mxu0 %v329
    %454 = vmatprep.subr.bf16.mxu0 %v336
    %455 = vmatpush1.bf16.msra.mxu0 %v335
    %456 = vmatprep.subr.bf16.mxu0 %v342
    %457 = vmatpush1.bf16.msra.mxu0 %v341
    %458 = vmatprep.subr.bf16.mxu0 %v348
    %459 = vmatpush1.bf16.msra.mxu0 %v347
    %460 = vmatprep.subr.bf16.mxu0 %v354
    %461 = vmatpush1.bf16.msra.mxu0 %v353
    %462 = vmatprep.subr.bf16.mxu0 0
    %463 = vmatpush1.bf16.msra.mxu0 0
    %464 = vmatprep.subr.bf16.mxu0 0
    %465 = vmatpush1.bf16.msra.mxu0 0
    %466 = vmatprep.subr.bf16.mxu0 0
    %467 = vmatpush1.bf16.msra.mxu0 0
    %468 = vmatprep.subr.bf16.mxu0 0
    %469 = vmatpush1.bf16.msra.mxu0 0
    %470 = vmatprep.subr.bf16.mxu0 0
    %471 = vmatpush1.bf16.msra.mxu0 0
    %472 = vmatprep.subr.bf16.mxu0 0
    %473 = vmatpush1.bf16.msra.mxu0 0
    %474 = vmatprep.subr.bf16.mxu0 0
    %475 = vmatpush1.bf16.msra.mxu0 0
    %476 = vmatprep.subr.bf16.mxu0 0
    %477 = vmatpush1.bf16.msra.mxu0 0
    %478 = vmatprep.mubr.bf16.mxu0 0
    %479 = vmatmul.mubr.bf16.gmra.mrb[0].mxu0 %v84
    %v480 = vpop.f32.mrb[0].mxu0
    %v481 = vadd.f32 %v146, %v480
    %v482 = vpop.f32.mrb[0].mxu0
    %v483 = vadd.f32 %v150, %v482
    %v484 = vpop.f32.mrb[0].mxu0
    %v485 = vpop.f32.mrb[0].mxu0
    %486 = vdwg.mxu0
    %487 = vmatprep.subr.bf16.mxu0 %v314
    %488 = vmatpush1.bf16.msra.mxu0 %v313
    %489 = vmatprep.subr.bf16.mxu0 %v320
    %490 = vmatpush1.bf16.msra.mxu0 %v319
    %491 = vmatprep.subr.bf16.mxu0 %v326
    %492 = vmatpush1.bf16.msra.mxu0 %v325
    %493 = vmatprep.subr.bf16.mxu0 %v332
    %494 = vmatpush1.bf16.msra.mxu0 %v331
    %495 = vmatprep.subr.bf16.mxu0 %v338
    %496 = vmatpush1.bf16.msra.mxu0 %v337
    %497 = vmatprep.subr.bf16.mxu0 %v344
    %498 = vmatpush1.bf16.msra.mxu0 %v343
    %499 = vmatprep.subr.bf16.mxu0 %v350
    %500 = vmatpush1.bf16.msra.mxu0 %v349
    %501 = vmatprep.subr.bf16.mxu0 %v356
    %502 = vmatpush1.bf16.msra.mxu0 %v355
    %503 = vmatprep.subr.bf16.mxu0 0
    %504 = vmatpush1.bf16.msra.mxu0 0
    %505 = vmatprep.subr.bf16.mxu0 0
    %506 = vmatpush1.bf16.msra.mxu0 0
    %507 = vmatprep.subr.bf16.mxu0 0
    %508 = vmatpush1.bf16.msra.mxu0 0
    %509 = vmatprep.subr.bf16.mxu0 0
    %510 = vmatpush1.bf16.msra.mxu0 0
    %511 = vmatprep.subr.bf16.mxu0 0
    %512 = vmatpush1.bf16.msra.mxu0 0
    %513 = vmatprep.subr.bf16.mxu0 0
    %514 = vmatpush1.bf16.msra.mxu0 0
    %515 = vmatprep.subr.bf16.mxu0 0
    %516 = vmatpush1.bf16.msra.mxu0 0
    %517 = vmatprep.subr.bf16.mxu0 0
    %518 = vmatpush1.bf16.msra.mxu0 0
    %519 = vmatprep.mubr.bf16.mxu0 0
    %520 = vmatmul.mubr.bf16.gmra.mrb[0].mxu0 %v84
    %v521 = vpop.f32.mrb[0].mxu0
    %v522 = vadd.f32 %v154, %v521
    %v523 = vpop.f32.mrb[0].mxu0
    %v524 = vadd.f32 %v158, %v523
    %v525 = vpop.f32.mrb[0].mxu0
    %v526 = vpop.f32.mrb[0].mxu0
    %527 = vdwg.mxu0
    %v528 = vmax.f32 %v440, 0.0
    %v529 = vmax.f32 %v442, 0.0
    %v530 = vmax.f32 %v481, 0.0
    %v531 = vmax.f32 %v483, 0.0
    %v532 = vmax.f32 %v522, 0.0
    %v533 = vmax.f32 %v524, 0.0
    %v534 = vpack.c.bf16 %v528, %v528
    %v535 = vpack.c.bf16 %v529, %v529
    %v536 = vpack.c.bf16 %v530, %v530
    %v537 = vpack.c.bf16 %v531, %v531
    %v538 = vpack.c.bf16 %v532, %v532
    %v539 = vpack.c.bf16 %v533, %v533
    %v540 = vld [vmem:[#allocation8] sm:$0xf]
    %v541 = vld [vmem:[#allocation8 + $0x4] sm:$0xf]
    %v542 = vld [vmem:[#allocation8 + $0x8] sm:$0xf]
    %v543 = vld [vmem:[#allocation8 + $0xc] sm:$0xf]
    %v544 = vld [vmem:[#allocation8 + $0x10] sm:$0xf]
    %v545 = vld [vmem:[#allocation8 + $0x14] sm:$0xf]
    %v546 = vld [vmem:[#allocation8 + $0x18] sm:$0xf]
    %v547 = vld [vmem:[#allocation8 + $0x1c] sm:$0xf]
    %v548 = vld [vmem:[#allocation8 + $0x20] sm:$0xf]
    %v549 = vld [vmem:[#allocation8 + $0x24] sm:$0xf]
    %v550 = vld [vmem:[#allocation8 + $0x28] sm:$0xf]
    %v551 = vld [vmem:[#allocation8 + $0x2c] sm:$0xf]
    %v552 = vld [vmem:[#allocation8 + $0x30] sm:$0xf]
    %v553 = vld [vmem:[#allocation8 + $0x34] sm:$0xf]
    %v554 = vld [vmem:[#allocation8 + $0x38] sm:$0xf]
    %v555 = vld [vmem:[#allocation8 + $0x3c] sm:$0xf]
    %v556 = vld [vmem:[#allocation8 + $0x40] sm:$0xf]
    %v557 = vld [vmem:[#allocation8 + $0x44] sm:$0xf]
    %v558 = vld [vmem:[#allocation8 + $0x48] sm:$0xf]
    %v559 = vld [vmem:[#allocation8 + $0x4c] sm:$0xf]
    %v560 = vld [vmem:[#allocation8 + $0x50] sm:$0xf]
    %v561 = vld [vmem:[#allocation8 + $0x54] sm:$0xf]
    %v562 = vld [vmem:[#allocation8 + $0x58] sm:$0xf]
    %v563 = vld [vmem:[#allocation8 + $0x5c] sm:$0xf]
    %v564 = vld [vmem:[#allocation8 + $0x60] sm:$0xf]
    %v565 = vld [vmem:[#allocation8 + $0x64] sm:$0xf]
    %v566 = vld [vmem:[#allocation8 + $0x68] sm:$0xf]
    %v567 = vld [vmem:[#allocation8 + $0x6c] sm:$0xf]
    %v568 = vld [vmem:[#allocation8 + $0x70] sm:$0xf]
    %v569 = vld [vmem:[#allocation8 + $0x74] sm:$0xf]
    %v570 = vld [vmem:[#allocation8 + $0x78] sm:$0xf]
    %v571 = vld [vmem:[#allocation8 + $0x7c] sm:$0xf]
    %v572 = vld [vmem:[#allocation8 + $0x80] sm:$0xf]
    %v573 = vld [vmem:[#allocation8 + $0x84] sm:$0xf]
    %v574 = vld [vmem:[#allocation8 + $0x88] sm:$0xf]
    %v575 = vld [vmem:[#allocation8 + $0x8c] sm:$0xf]
    %v576 = vld [vmem:[#allocation8 + $0x90] sm:$0xf]
    %v577 = vld [vmem:[#allocation8 + $0x94] sm:$0xf]
    %v578 = vld [vmem:[#allocation8 + $0x98] sm:$0xf]
    %v579 = vld [vmem:[#allocation8 + $0x9c] sm:$0xf]
    %v580 = vld [vmem:[#allocation8 + $0xa0] sm:$0xf]
    %v581 = vld [vmem:[#allocation8 + $0xa4] sm:$0xf]
    %v582 = vld [vmem:[#allocation8 + $0xa8] sm:$0xf]
    %v583 = vld [vmem:[#allocation8 + $0xac] sm:$0xf]
    %v584 = vld [vmem:[#allocation8 + $0xb0] sm:$0xf]
    %v585 = vld [vmem:[#allocation8 + $0xb4] sm:$0xf]
    %v586 = vld [vmem:[#allocation8 + $0xb8] sm:$0xf]
    %v587 = vld [vmem:[#allocation8 + $0xbc] sm:$0xf]
    %v588 = vld [vmem:[#allocation8 + $0xc0] sm:$0xf]
    %v589 = vld [vmem:[#allocation8 + $0xc4] sm:$0xf]
    %v590 = vld [vmem:[#allocation8 + $0xc8] sm:$0xf]
    %v591 = vld [vmem:[#allocation8 + $0xcc] sm:$0xf]
    %v592 = vld [vmem:[#allocation8 + $0xd0] sm:$0xf]
    %v593 = vld [vmem:[#allocation8 + $0xd4] sm:$0xf]
    %v594 = vld [vmem:[#allocation8 + $0xd8] sm:$0xf]
    %v595 = vld [vmem:[#allocation8 + $0xdc] sm:$0xf]
    %v596 = vld [vmem:[#allocation8 + $0xe0] sm:$0xf]
    %v597 = vld [vmem:[#allocation8 + $0xe4] sm:$0xf]
    %v598 = vld [vmem:[#allocation8 + $0xe8] sm:$0xf]
    %v599 = vld [vmem:[#allocation8 + $0xec] sm:$0xf]
    %v600 = vld [vmem:[#allocation8 + $0xf0] sm:$0xf]
    %v601 = vld [vmem:[#allocation8 + $0xf4] sm:$0xf]
    %v602 = vld [vmem:[#allocation8 + $0xf8] sm:$0xf]
    %v603 = vld [vmem:[#allocation8 + $0xfc] sm:$0xf]
    %v604 = vld [vmem:[#allocation8 + $0x100] sm:$0xf]
    %v605 = vld [vmem:[#allocation8 + $0x104] sm:$0xf]
    %v606 = vld [vmem:[#allocation8 + $0x108] sm:$0xf]
    %v607 = vld [vmem:[#allocation8 + $0x10c] sm:$0xf]
    %v608 = vld [vmem:[#allocation8 + $0x110] sm:$0xf]
    %v609 = vld [vmem:[#allocation8 + $0x114] sm:$0xf]
    %v610 = vld [vmem:[#allocation8 + $0x118] sm:$0xf]
    %v611 = vld [vmem:[#allocation8 + $0x11c] sm:$0xf]
    %v612 = vld [vmem:[#allocation8 + $0x120] sm:$0xf]
    %v613 = vld [vmem:[#allocation8 + $0x124] sm:$0xf]
    %v614 = vld [vmem:[#allocation8 + $0x128] sm:$0xf]
    %v615 = vld [vmem:[#allocation8 + $0x12c] sm:$0xf]
    %v616 = vld [vmem:[#allocation8 + $0x130] sm:$0xf]
    %v617 = vld [vmem:[#allocation8 + $0x134] sm:$0xf]
    %v618 = vld [vmem:[#allocation8 + $0x138] sm:$0xf]
    %v619 = vld [vmem:[#allocation8 + $0x13c] sm:$0xf]
    %v620 = vld [vmem:[#allocation8 + $0x140] sm:$0xf]
    %v621 = vld [vmem:[#allocation8 + $0x144] sm:$0xf]
    %v622 = vld [vmem:[#allocation8 + $0x148] sm:$0xf]
    %v623 = vld [vmem:[#allocation8 + $0x14c] sm:$0xf]
    %v624 = vld [vmem:[#allocation8 + $0x150] sm:$0xf]
    %v625 = vld [vmem:[#allocation8 + $0x154] sm:$0xf]
    %v626 = vld [vmem:[#allocation8 + $0x158] sm:$0xf]
    %v627 = vld [vmem:[#allocation8 + $0x15c] sm:$0xf]
    %v628 = vld [vmem:[#allocation8 + $0x160] sm:$0xf]
    %v629 = vld [vmem:[#allocation8 + $0x164] sm:$0xf]
    %v630 = vld [vmem:[#allocation8 + $0x168] sm:$0xf]
    %v631 = vld [vmem:[#allocation8 + $0x16c] sm:$0xf]
    %v632 = vld [vmem:[#allocation8 + $0x170] sm:$0xf]
    %v633 = vld [vmem:[#allocation8 + $0x174] sm:$0xf]
    %v634 = vld [vmem:[#allocation8 + $0x178] sm:$0xf]
    %v635 = vld [vmem:[#allocation8 + $0x17c] sm:$0xf]
    %v636 = vld [vmem:[#allocation10] sm:$0x1]
    %v638 = vlaneseq
    %v639 = vshrl.u32 %v638, 7
    %v640 = vsub.s32 0, %v639
    %v641 = vrot.slane %v636, %v640
    %v739 = vunpack.c.l.b16 %v540
    %v740 = vunpack.c.l.b16 %v541
    %v741 = vunpack.c.l.b16 %v542
    %v742 = vunpack.c.l.b16 %v543
    %v743 = vunpack.c.l.b16 %v544
    %v744 = vunpack.c.l.b16 %v545
    %v745 = vunpack.c.l.b16 %v546
    %v746 = vunpack.c.l.b16 %v547
    %v747 = vunpack.c.l.b16 %v548
    %v748 = vunpack.c.l.b16 %v549
    %v749 = vunpack.c.l.b16 %v550
    %v750 = vunpack.c.l.b16 %v551
    %v751 = vunpack.c.l.b16 %v552
    %v752 = vunpack.c.l.b16 %v553
    %v753 = vunpack.c.l.b16 %v554
    %v754 = vunpack.c.l.b16 %v555
    %v755 = vunpack.c.l.b16 %v556
    %v756 = vunpack.c.l.b16 %v557
    %v757 = vunpack.c.l.b16 %v558
    %v758 = vunpack.c.l.b16 %v559
    %v759 = vunpack.c.l.b16 %v560
    %v760 = vunpack.c.l.b16 %v561
    %v761 = vunpack.c.l.b16 %v562
    %v762 = vunpack.c.l.b16 %v563
    %v763 = vunpack.c.l.b16 %v564
    %v764 = vunpack.c.l.b16 %v565
    %v765 = vunpack.c.l.b16 %v566
    %v766 = vunpack.c.l.b16 %v567
    %v767 = vunpack.c.l.b16 %v568
    %v768 = vunpack.c.l.b16 %v569
    %v769 = vunpack.c.l.b16 %v570
    %v770 = vunpack.c.l.b16 %v571
    %v771 = vunpack.c.l.b16 %v572
    %v772 = vunpack.c.l.b16 %v573
    %v773 = vunpack.c.l.b16 %v574
    %v774 = vunpack.c.l.b16 %v575
    %v775 = vunpack.c.l.b16 %v576
    %v776 = vunpack.c.l.b16 %v577
    %v777 = vunpack.c.l.b16 %v578
    %v778 = vunpack.c.l.b16 %v579
    %v779 = vunpack.c.l.b16 %v580
    %v780 = vunpack.c.l.b16 %v581
    %v781 = vunpack.c.l.b16 %v582
    %v782 = vunpack.c.l.b16 %v583
    %v783 = vunpack.c.l.b16 %v584
    %v784 = vunpack.c.l.b16 %v585
    %v785 = vunpack.c.l.b16 %v586
    %v786 = vunpack.c.l.b16 %v587
    %v787 = vunpack.c.l.b16 %v588
    %v788 = vunpack.c.l.b16 %v589
    %v789 = vunpack.c.l.b16 %v590
    %v790 = vunpack.c.l.b16 %v591
    %v791 = vunpack.c.l.b16 %v592
    %v792 = vunpack.c.l.b16 %v593
    %v793 = vunpack.c.l.b16 %v594
    %v794 = vunpack.c.l.b16 %v595
    %v795 = vunpack.c.l.b16 %v596
    %v796 = vunpack.c.l.b16 %v597
    %v797 = vunpack.c.l.b16 %v598
    %v798 = vunpack.c.l.b16 %v599
    %v799 = vunpack.c.l.b16 %v600
    %v800 = vunpack.c.l.b16 %v601
    %v801 = vunpack.c.l.b16 %v602
    %v802 = vunpack.c.l.b16 %v603
    %v803 = vunpack.c.l.b16 %v604
    %v804 = vunpack.c.l.b16 %v605
    %v805 = vunpack.c.l.b16 %v606
    %v806 = vunpack.c.l.b16 %v607
    %v807 = vunpack.c.l.b16 %v608
    %v808 = vunpack.c.l.b16 %v609
    %v809 = vunpack.c.l.b16 %v610
    %v810 = vunpack.c.l.b16 %v611
    %v811 = vunpack.c.l.b16 %v612
    %v812 = vunpack.c.l.b16 %v613
    %v813 = vunpack.c.l.b16 %v614
    %v814 = vunpack.c.l.b16 %v615
    %v815 = vunpack.c.l.b16 %v616
    %v816 = vunpack.c.l.b16 %v617
    %v817 = vunpack.c.l.b16 %v618
    %v818 = vunpack.c.l.b16 %v619
    %v819 = vunpack.c.l.b16 %v620
    %v820 = vunpack.c.l.b16 %v621
    %v821 = vunpack.c.l.b16 %v622
    %v822 = vunpack.c.l.b16 %v623
    %v823 = vunpack.c.l.b16 %v624
    %v824 = vunpack.c.l.b16 %v625
    %v825 = vunpack.c.l.b16 %v626
    %v826 = vunpack.c.l.b16 %v627
    %v827 = vunpack.c.l.b16 %v628
    %v828 = vunpack.c.l.b16 %v629
    %v829 = vunpack.c.l.b16 %v630
    %v830 = vunpack.c.l.b16 %v631
    %v831 = vunpack.c.l.b16 %v632
    %v832 = vunpack.c.l.b16 %v633
    %v833 = vunpack.c.l.b16 %v634
    %v834 = vunpack.c.l.b16 %v635
    %v835 = vpack.c.b16 %v740, %v739
    %v836 = vpack.c.b16 %v742, %v741
    %v837 = vpack.c.b16 %v744, %v743
    %v838 = vpack.c.b16 %v746, %v745
    %v839 = vpack.c.b16 %v748, %v747
    %v840 = vpack.c.b16 %v750, %v749
    %v841 = vpack.c.b16 %v752, %v751
    %v842 = vpack.c.b16 %v754, %v753
    %v843 = vpack.c.b16 %v756, %v755
    %v844 = vpack.c.b16 %v758, %v757
    %v845 = vpack.c.b16 %v760, %v759
    %v846 = vpack.c.b16 %v762, %v761
    %v847 = vpack.c.b16 %v764, %v763
    %v848 = vpack.c.b16 %v766, %v765
    %v849 = vpack.c.b16 %v768, %v767
    %v850 = vpack.c.b16 %v770, %v769
    %v851 = vpack.c.b16 %v772, %v771
    %v852 = vpack.c.b16 %v774, %v773
    %v853 = vpack.c.b16 %v776, %v775
    %v854 = vpack.c.b16 %v778, %v777
    %v855 = vpack.c.b16 %v780, %v779
    %v856 = vpack.c.b16 %v782, %v781
    %v857 = vpack.c.b16 %v784, %v783
    %v858 = vpack.c.b16 %v786, %v785
    %v859 = vpack.c.b16 %v788, %v787
    %v860 = vpack.c.b16 %v790, %v789
    %v861 = vpack.c.b16 %v792, %v791
    %v862 = vpack.c.b16 %v794, %v793
    %v863 = vpack.c.b16 %v796, %v795
    %v864 = vpack.c.b16 %v798, %v797
    %v865 = vpack.c.b16 %v800, %v799
    %v866 = vpack.c.b16 %v802, %v801
    %v867 = vpack.c.b16 %v804, %v803
    %v868 = vpack.c.b16 %v806, %v805
    %v869 = vpack.c.b16 %v808, %v807
    %v870 = vpack.c.b16 %v810, %v809
    %v871 = vpack.c.b16 %v812, %v811
    %v872 = vpack.c.b16 %v814, %v813
    %v873 = vpack.c.b16 %v816, %v815
    %v874 = vpack.c.b16 %v818, %v817
    %v875 = vpack.c.b16 %v820, %v819
    %v876 = vpack.c.b16 %v822, %v821
    %v877 = vpack.c.b16 %v824, %v823
    %v878 = vpack.c.b16 %v826, %v825
    %v879 = vpack.c.b16 %v828, %v827
    %v880 = vpack.c.b16 %v830, %v829
    %v881 = vpack.c.b16 %v832, %v831
    %v882 = vpack.c.b16 %v834, %v833
    %931 = vmatprep.subr.bf16.mxu0 0
    %932 = vmatpush1.bf16.msra.mxu0 %v835
    %933 = vmatprep.subr.bf16.mxu0 0
    %934 = vmatpush1.bf16.msra.mxu0 %v836
    %935 = vmatprep.subr.bf16.mxu0 0
    %936 = vmatpush1.bf16.msra.mxu0 %v837
    %937 = vmatprep.subr.bf16.mxu0 0
    %938 = vmatpush1.bf16.msra.mxu0 %v838
    %939 = vmatprep.subr.bf16.mxu0 0
    %940 = vmatpush1.bf16.msra.mxu0 %v839
    %941 = vmatprep.subr.bf16.mxu0 0
    %942 = vmatpush1.bf16.msra.mxu0 %v840
    %943 = vmatprep.subr.bf16.mxu0 0
    %944 = vmatpush1.bf16.msra.mxu0 %v841
    %945 = vmatprep.subr.bf16.mxu0 0
    %946 = vmatpush1.bf16.msra.mxu0 %v842
    %947 = vmatprep.subr.bf16.mxu0 0
    %948 = vmatpush1.bf16.msra.mxu0 %v843
    %949 = vmatprep.subr.bf16.mxu0 0
    %950 = vmatpush1.bf16.msra.mxu0 %v844
    %951 = vmatprep.subr.bf16.mxu0 0
    %952 = vmatpush1.bf16.msra.mxu0 %v845
    %953 = vmatprep.subr.bf16.mxu0 0
    %954 = vmatpush1.bf16.msra.mxu0 %v846
    %955 = vmatprep.subr.bf16.mxu0 0
    %956 = vmatpush1.bf16.msra.mxu0 %v847
    %957 = vmatprep.subr.bf16.mxu0 0
    %958 = vmatpush1.bf16.msra.mxu0 %v848
    %959 = vmatprep.subr.bf16.mxu0 0
    %960 = vmatpush1.bf16.msra.mxu0 %v849
    %961 = vmatprep.subr.bf16.mxu0 0
    %962 = vmatpush1.bf16.msra.mxu0 %v850
    %963 = vmatprep.mubr.bf16.mxu0 %v535
    %964 = vmatmul.mubr.bf16.gmra.mrb[0].mxu0 %v534
    %v965 = vpop.f32.mrb[0].mxu0
    %v966 = vadd.f32 %v641, %v965
    %v967 = vpop.f32.mrb[0].mxu0
    %v968 = vpop.f32.mrb[0].mxu0
    %v969 = vpop.f32.mrb[0].mxu0
    %970 = vdwg.mxu0
    %971 = vmatprep.subr.bf16.mxu0 0
    %972 = vmatpush1.bf16.msra.mxu0 %v851
    %973 = vmatprep.subr.bf16.mxu0 0
    %974 = vmatpush1.bf16.msra.mxu0 %v852
    %975 = vmatprep.subr.bf16.mxu0 0
    %976 = vmatpush1.bf16.msra.mxu0 %v853
    %977 = vmatprep.subr.bf16.mxu0 0
    %978 = vmatpush1.bf16.msra.mxu0 %v854
    %979 = vmatprep.subr.bf16.mxu0 0
    %980 = vmatpush1.bf16.msra.mxu0 %v855
    %981 = vmatprep.subr.bf16.mxu0 0
    %982 = vmatpush1.bf16.msra.mxu0 %v856
    %983 = vmatprep.subr.bf16.mxu0 0
    %984 = vmatpush1.bf16.msra.mxu0 %v857
    %985 = vmatprep.subr.bf16.mxu0 0
    %986 = vmatpush1.bf16.msra.mxu0 %v858
    %987 = vmatprep.subr.bf16.mxu0 0
    %988 = vmatpush1.bf16.msra.mxu0 %v859
    %989 = vmatprep.subr.bf16.mxu0 0
    %990 = vmatpush1.bf16.msra.mxu0 %v860
    %991 = vmatprep.subr.bf16.mxu0 0
    %992 = vmatpush1.bf16.msra.mxu0 %v861
    %993 = vmatprep.subr.bf16.mxu0 0
    %994 = vmatpush1.bf16.msra.mxu0 %v862
    %995 = vmatprep.subr.bf16.mxu0 0
    %996 = vmatpush1.bf16.msra.mxu0 %v863
    %997 = vmatprep.subr.bf16.mxu0 0
    %998 = vmatpush1.bf16.msra.mxu0 %v864
    %999 = vmatprep.subr.bf16.mxu0 0
    %1000 = vmatpush1.bf16.msra.mxu0 %v865
    %1001 = vmatprep.subr.bf16.mxu0 0
    %1002 = vmatpush1.bf16.msra.mxu0 %v866
    %1003 = vmatprep.mubr.bf16.mxu0 %v537
    %1004 = vmatmul.mubr.bf16.gmra.mrb[0].mxu0 %v536
    %v1005 = vpop.f32.mrb[0].mxu0
    %v1006 = vadd.f32 %v966, %v1005
    %v1007 = vpop.f32.mrb[0].mxu0
    %v1008 = vpop.f32.mrb[0].mxu0
    %v1009 = vpop.f32.mrb[0].mxu0
    %1010 = vdwg.mxu0
    %1011 = vmatprep.subr.bf16.mxu0 0
    %1012 = vmatpush1.bf16.msra.mxu0 %v867
    %1013 = vmatprep.subr.bf16.mxu0 0
    %1014 = vmatpush1.bf16.msra.mxu0 %v868
    %1015 = vmatprep.subr.bf16.mxu0 0
    %1016 = vmatpush1.bf16.msra.mxu0 %v869
    %1017 = vmatprep.subr.bf16.mxu0 0
    %1018 = vmatpush1.bf16.msra.mxu0 %v870
    %1019 = vmatprep.subr.bf16.mxu0 0
    %1020 = vmatpush1.bf16.msra.mxu0 %v871
    %1021 = vmatprep.subr.bf16.mxu0 0
    %1022 = vmatpush1.bf16.msra.mxu0 %v872
    %1023 = vmatprep.subr.bf16.mxu0 0
    %1024 = vmatpush1.bf16.msra.mxu0 %v873
    %1025 = vmatprep.subr.bf16.mxu0 0
    %1026 = vmatpush1.bf16.msra.mxu0 %v874
    %1027 = vmatprep.subr.bf16.mxu0 0
    %1028 = vmatpush1.bf16.msra.mxu0 %v875
    %1029 = vmatprep.subr.bf16.mxu0 0
    %1030 = vmatpush1.bf16.msra.mxu0 %v876
    %1031 = vmatprep.subr.bf16.mxu0 0
    %1032 = vmatpush1.bf16.msra.mxu0 %v877
    %1033 = vmatprep.subr.bf16.mxu0 0
    %1034 = vmatpush1.bf16.msra.mxu0 %v878
    %1035 = vmatprep.subr.bf16.mxu0 0
    %1036 = vmatpush1.bf16.msra.mxu0 %v879
    %1037 = vmatprep.subr.bf16.mxu0 0
    %1038 = vmatpush1.bf16.msra.mxu0 %v880
    %1039 = vmatprep.subr.bf16.mxu0 0
    %1040 = vmatpush1.bf16.msra.mxu0 %v881
    %1041 = vmatprep.subr.bf16.mxu0 0
    %1042 = vmatpush1.bf16.msra.mxu0 %v882
    %1043 = vmatprep.mubr.bf16.mxu0 %v539
    %1044 = vmatmul.mubr.bf16.gmra.mrb[0].mxu0 %v538
    %v1045 = vpop.f32.mrb[0].mxu0
    %v1046 = vadd.f32 %v1006, %v1045
    %v1047 = vpop.f32.mrb[0].mxu0
    %v1048 = vpop.f32.mrb[0].mxu0
    %v1049 = vpop.f32.mrb[0].mxu0
    %1050 = vdwg.mxu0
    %v1051 = vtanh.pop %v1046
    %1052 = vst [vmem:[#allocation11] sm:$0xff] %v1051
    // Predicated region
    $region42: #{_lambda_.1} parent=1 // pred_check
      _
    $region43: #{_lambda_.1} parent=1 // pred_check_branch
      %1054 = sbr.rel (0) target = $region45
    $region44: #{_lambda_.1} parent=1 // pred_region
      %s1056 = ssub.s32 128, 128
      %1057 = vsyncadd [#allocation4], %s1056
      %s1059 = sshll.u32 [#allocation11], 4
      %s1060 = int_to_ptr.vmem [resolvable:$true] %s1059
      %1062 = dma.vmem_to_hbm [thread:$0]  %s1060, 128, %s5, [#allocation4]
    $region45: #{_lambda_.1} parent=1 // pred_fallthru
      _
    // Predicated region
    $region46: #{_lambda_.1} parent=1 // pred_check
      _
    $region47: #{_lambda_.1} parent=1 // pred_check_branch
      %1064 = sbr.rel (0) target = $region49
    $region48: #{_lambda_.1} parent=1 // pred_region
      %1065 = dma.done [#allocation4], 128
    $region49: #{_lambda_.1} parent=1 // pred_fallthru
      _
    %1066 = vsyncpa [#allocation3], 1
    %1067 = vsyncpa [#allocation6], 1
    %1068 = vsyncpa [#allocation9], 1
    %1069 = vsyncpa [#allocation4], 1

</llo_original>
